<compile_context>
chip_gen: v7x
topology: tpu7x:2x2x1
jax: 0.10.0
libtpu: 0.0.40
codegen_flags: <defaults>
</compile_context>

<pallas_src>
import functools

import jax
import jax.numpy as jnp
from jax.experimental import pallas as pl
from jax.experimental.pallas import tpu as pltpu


def fused_sepconv_kernel(x_ref, wdw_ref, wpw_ref, o_ref, *, n, cin, cout, kh, kw, w, hw):
    # x_ref:   (N*Cin,  H*W)     VMEM, lane-dense packed input (row r = b*Cin + ci)
    # wdw_ref: (KH*KW, N*Cin, 1) VMEM, depthwise taps as per-sublane vectors
    # wpw_ref: (Cin,  Cout,  1)  VMEM, pointwise weight columns (per-sublane over Cout)
    # o_ref:   (N*Cout, H*W)     VMEM, lane-dense padded output (row r = b*Cout + co)

    x = x_ref[...].astype(jnp.float32)                 # whole input: 2 vregs at test shape

    # ---- Stage 1: depthwise valid conv (stride=1, pad=0, cross-correlation). ----
    # Tap (dy, dx) == lane roll by dy*W + dx on the flattened H*W axis.  Positions whose
    # value would cross a row boundary or wrap around end up only at w >= Wo or h >= Ho,
    # which the wrapper slices away.  First tap (0,0) initializes the accumulator.
    acc = x * wdw_ref[0]                               # (N*Cin, H*W), no roll, no zeros
    for dy in range(kh):
        for dx in range(kw):
            t = dy * kw + dx
            if t == 0:
                continue
            s = dy * w + dx
            xs = pltpu.roll(x, shift=hw - s, axis=1)   # xs[:, p] = x[:, p + s]  (valid p)
            acc = acc + xs * wdw_ref[t]                # per-sublane tap, lane-dense FMA

    # ---- Stage 2: pointwise 1x1 conv on the VPU. ----
    # For each batch element, broadcast each depthwise channel row across the Cout
    # sublanes and FMA with the per-sublane weight column: 4 FMAs -> full (Cout, H*W)
    # slab, stored with one lane-dense, sublane-aligned store.
    for b in range(n):
        out_b = None
        for ci in range(cin):
            row = acc[b * cin + ci: b * cin + ci + 1, :]      # (1, H*W)
            term = row * wpw_ref[ci]                          # (Cout, H*W)
            out_b = term if out_b is None else out_b + term
        o_ref[b * cout:(b + 1) * cout, :] = out_b.astype(o_ref.dtype)


def separable_conv2d(x_nchw, w_dw, w_pw):
    """x_nchw: (N, Cin, H, W); w_dw: (Cin, 1, KH, KW); w_pw: (Cout, Cin, 1, 1)."""
    N, Cin, H, W = x_nchw.shape
    KH, KW = int(w_dw.shape[2]), int(w_dw.shape[3])
    Cout = int(w_pw.shape[0])
    Ho, Wo = H - KH + 1, W - KW + 1                    # Conv2d defaults: stride=1, pad=0
    HW = H * W

    # Lane-dense packing: NCHW is contiguous, so this is a pure reshape (no copy).
    x_flat = x_nchw.reshape(N * Cin, HW)               # (8, 256) at test shape

    # Depthwise taps as per-sublane vectors: wdw_vec[t, b*Cin+ci, 0] = w_dw[ci, 0, dy, dx].
    wdw_vec = jnp.tile(w_dw[:, 0, :, :].reshape(Cin, KH * KW).T, (1, N))[:, :, None]
    # Pointwise weight columns: wpw_cols[ci, co, 0] = w_pw[co, ci].
    wpw_cols = w_pw[:, :, 0, 0].T[:, :, None]

    kernel = functools.partial(
        fused_sepconv_kernel, n=N, cin=Cin, cout=Cout, kh=KH, kw=KW, w=W, hw=HW)

    out_flat = pl.pallas_call(
        kernel,
        out_shape=jax.ShapeDtypeStruct((N * Cout, HW), x_nchw.dtype),
        grid_spec=pltpu.PrefetchScalarGridSpec(
            num_scalar_prefetch=0,
            grid=(1,),                                  # single step: no per-step overhead
            in_specs=[
                pl.BlockSpec((N * Cin, HW), lambda i: (0, 0)),
                pl.BlockSpec((KH * KW, N * Cin, 1), lambda i: (0, 0, 0)),
                pl.BlockSpec((Cin, Cout, 1), lambda i: (0, 0, 0)),
            ],
            out_specs=pl.BlockSpec((N * Cout, HW), lambda i: (0, 0)),
        ),
        compiler_params=pltpu.CompilerParams(
            dimension_semantics=("arbitrary",)),
    )(x_flat, wdw_vec, wpw_cols)

    # Unpack the lane-dense padded slab and slice the valid (Ho, Wo) region (wrapper-side
    # layout plumbing; keeps every in-kernel store unmasked / lane-dense).
    return out_flat.reshape(N, Cout, H, W)[:, :, :Ho, :Wo]


def reference(x_nchw, w_dw, w_pw):
    Cin = x_nchw.shape[1]
    dn = ("NCHW", "OIHW", "NCHW")
    dw = jax.lax.conv_general_dilated(
        x_nchw, w_dw, window_strides=(1, 1), padding="VALID",
        feature_group_count=Cin, dimension_numbers=dn)
    return jax.lax.conv_general_dilated(
        dw, w_pw, window_strides=(1, 1), padding="VALID", dimension_numbers=dn)


if __name__ == "__main__":
    # Module config: SeperableConv2d(input_channels=4, output_channels=8, kernel_size=3)
    N, Cin, Cout, H, W, K = 2, 4, 8, 16, 16, 3

    key = jax.random.PRNGKey(0)
    kx, kdw, kpw = jax.random.split(key, 3)
    x = jax.random.normal(kx, (N, Cin, H, W), dtype=jnp.float32)
    # nn.Conv2d parameter shapes (bias=False).
    w_dw = jax.random.normal(kdw, (Cin, 1, K, K), dtype=jnp.float32) * 0.1     # depthwise
    w_pw = jax.random.normal(kpw, (Cout, Cin, 1, 1), dtype=jnp.float32) * 0.1  # pointwise

    out = jax.block_until_ready(separable_conv2d(x, w_dw, w_pw))
    ref = jax.block_until_ready(reference(x, w_dw, w_pw))

    assert out.shape == (N, Cout, H - K + 1, W - K + 1), out.shape
    assert jnp.allclose(out, ref, rtol=1e-4, atol=1e-4), float(jnp.max(jnp.abs(out - ref)))
    print("KERNEL_OK")
</pallas_src>

<mosaic_0001>
module attributes {stable_mosaic.version = 11 : i64} {
  func.func @fused_sepconv_kernel(%arg0: i32, %arg1: memref<8x256xf32, #tpu.memory_space<vmem>>, %arg2: memref<9x8x1xf32, #tpu.memory_space<vmem>>, %arg3: memref<4x8x1xf32, #tpu.memory_space<vmem>>, %arg4: memref<16x256xf32, #tpu.memory_space<vmem>>) attributes {dimension_semantics = [#tpu.dimension_semantics<arbitrary>], iteration_bounds = array<i64: 1>, scalar_prefetch = 0 : i64, scratch_operands = 0 : i64, tpu.core_type = #tpu.core_type<tc>, window_params = [{pipeline_mode = #tpu.pipeline_mode<synchronous>, transform_indices = @transform_0, window_bounds = array<i64: 8, 256>}, {pipeline_mode = #tpu.pipeline_mode<synchronous>, transform_indices = @transform_1, window_bounds = array<i64: 9, 8, 1>}, {pipeline_mode = #tpu.pipeline_mode<synchronous>, transform_indices = @transform_2, window_bounds = array<i64: 4, 8, 1>}, {pipeline_mode = #tpu.pipeline_mode<synchronous>, transform_indices = @transform_3, window_bounds = array<i64: 16, 256>}]} {
    %c0 = arith.constant 0 : index
    %c0_0 = arith.constant 0 : index
    %0 = vector.load %arg1[%c0, %c0_0] : memref<8x256xf32, #tpu.memory_space<vmem>>, vector<8x256xf32>
    %c0_1 = arith.constant 0 : index
    %c0_2 = arith.constant 0 : index
    %c0_3 = arith.constant 0 : index
    %1 = vector.load %arg2[%c0_1, %c0_2, %c0_3] : memref<9x8x1xf32, #tpu.memory_space<vmem>>, vector<1x8x1xf32>
    %2 = vector.shape_cast %1 : vector<1x8x1xf32> to vector<8x1xf32>
    %3 = vector.broadcast %2 : vector<8x1xf32> to vector<8x256xf32>
    %4 = arith.mulf %0, %3 : vector<8x256xf32>
    %c255_i32 = arith.constant 255 : i32
    %5 = tpu.dynamic_rotate %0 by %c255_i32 dim 1 : vector<8x256xf32>, i32 -> vector<8x256xf32>
    %c1 = arith.constant 1 : index
    %c0_4 = arith.constant 0 : index
    %c0_5 = arith.constant 0 : index
    %6 = vector.load %arg2[%c1, %c0_4, %c0_5] : memref<9x8x1xf32, #tpu.memory_space<vmem>>, vector<1x8x1xf32>
    %7 = vector.shape_cast %6 : vector<1x8x1xf32> to vector<8x1xf32>
    %8 = vector.broadcast %7 : vector<8x1xf32> to vector<8x256xf32>
    %9 = arith.mulf %5, %8 : vector<8x256xf32>
    %10 = arith.addf %4, %9 : vector<8x256xf32>
    %c254_i32 = arith.constant 254 : i32
    %11 = tpu.dynamic_rotate %0 by %c254_i32 dim 1 : vector<8x256xf32>, i32 -> vector<8x256xf32>
    %c2 = arith.constant 2 : index
    %c0_6 = arith.constant 0 : index
    %c0_7 = arith.constant 0 : index
    %12 = vector.load %arg2[%c2, %c0_6, %c0_7] : memref<9x8x1xf32, #tpu.memory_space<vmem>>, vector<1x8x1xf32>
    %13 = vector.shape_cast %12 : vector<1x8x1xf32> to vector<8x1xf32>
    %14 = vector.broadcast %13 : vector<8x1xf32> to vector<8x256xf32>
    %15 = arith.mulf %11, %14 : vector<8x256xf32>
    %16 = arith.addf %10, %15 : vector<8x256xf32>
    %c240_i32 = arith.constant 240 : i32
    %17 = tpu.dynamic_rotate %0 by %c240_i32 dim 1 : vector<8x256xf32>, i32 -> vector<8x256xf32>
    %c3 = arith.constant 3 : index
    %c0_8 = arith.constant 0 : index
    %c0_9 = arith.constant 0 : index
    %18 = vector.load %arg2[%c3, %c0_8, %c0_9] : memref<9x8x1xf32, #tpu.memory_space<vmem>>, vector<1x8x1xf32>
    %19 = vector.shape_cast %18 : vector<1x8x1xf32> to vector<8x1xf32>
    %20 = vector.broadcast %19 : vector<8x1xf32> to vector<8x256xf32>
    %21 = arith.mulf %17, %20 : vector<8x256xf32>
    %22 = arith.addf %16, %21 : vector<8x256xf32>
    %c239_i32 = arith.constant 239 : i32
    %23 = tpu.dynamic_rotate %0 by %c239_i32 dim 1 : vector<8x256xf32>, i32 -> vector<8x256xf32>
    %c4 = arith.constant 4 : index
    %c0_10 = arith.constant 0 : index
    %c0_11 = arith.constant 0 : index
    %24 = vector.load %arg2[%c4, %c0_10, %c0_11] : memref<9x8x1xf32, #tpu.memory_space<vmem>>, vector<1x8x1xf32>
    %25 = vector.shape_cast %24 : vector<1x8x1xf32> to vector<8x1xf32>
    %26 = vector.broadcast %25 : vector<8x1xf32> to vector<8x256xf32>
    %27 = arith.mulf %23, %26 : vector<8x256xf32>
    %28 = arith.addf %22, %27 : vector<8x256xf32>
    %c238_i32 = arith.constant 238 : i32
    %29 = tpu.dynamic_rotate %0 by %c238_i32 dim 1 : vector<8x256xf32>, i32 -> vector<8x256xf32>
    %c5 = arith.constant 5 : index
    %c0_12 = arith.constant 0 : index
    %c0_13 = arith.constant 0 : index
    %30 = vector.load %arg2[%c5, %c0_12, %c0_13] : memref<9x8x1xf32, #tpu.memory_space<vmem>>, vector<1x8x1xf32>
    %31 = vector.shape_cast %30 : vector<1x8x1xf32> to vector<8x1xf32>
    %32 = vector.broadcast %31 : vector<8x1xf32> to vector<8x256xf32>
    %33 = arith.mulf %29, %32 : vector<8x256xf32>
    %34 = arith.addf %28, %33 : vector<8x256xf32>
    %c224_i32 = arith.constant 224 : i32
    %35 = tpu.dynamic_rotate %0 by %c224_i32 dim 1 : vector<8x256xf32>, i32 -> vector<8x256xf32>
    %c6 = arith.constant 6 : index
    %c0_14 = arith.constant 0 : index
    %c0_15 = arith.constant 0 : index
    %36 = vector.load %arg2[%c6, %c0_14, %c0_15] : memref<9x8x1xf32, #tpu.memory_space<vmem>>, vector<1x8x1xf32>
    %37 = vector.shape_cast %36 : vector<1x8x1xf32> to vector<8x1xf32>
    %38 = vector.broadcast %37 : vector<8x1xf32> to vector<8x256xf32>
    %39 = arith.mulf %35, %38 : vector<8x256xf32>
    %40 = arith.addf %34, %39 : vector<8x256xf32>
    %c223_i32 = arith.constant 223 : i32
    %41 = tpu.dynamic_rotate %0 by %c223_i32 dim 1 : vector<8x256xf32>, i32 -> vector<8x256xf32>
    %c7 = arith.constant 7 : index
    %c0_16 = arith.constant 0 : index
    %c0_17 = arith.constant 0 : index
    %42 = vector.load %arg2[%c7, %c0_16, %c0_17] : memref<9x8x1xf32, #tpu.memory_space<vmem>>, vector<1x8x1xf32>
    %43 = vector.shape_cast %42 : vector<1x8x1xf32> to vector<8x1xf32>
    %44 = vector.broadcast %43 : vector<8x1xf32> to vector<8x256xf32>
    %45 = arith.mulf %41, %44 : vector<8x256xf32>
    %46 = arith.addf %40, %45 : vector<8x256xf32>
    %c222_i32 = arith.constant 222 : i32
    %47 = tpu.dynamic_rotate %0 by %c222_i32 dim 1 : vector<8x256xf32>, i32 -> vector<8x256xf32>
    %c8 = arith.constant 8 : index
    %c0_18 = arith.constant 0 : index
    %c0_19 = arith.constant 0 : index
    %48 = vector.load %arg2[%c8, %c0_18, %c0_19] : memref<9x8x1xf32, #tpu.memory_space<vmem>>, vector<1x8x1xf32>
    %49 = vector.shape_cast %48 : vector<1x8x1xf32> to vector<8x1xf32>
    %50 = vector.broadcast %49 : vector<8x1xf32> to vector<8x256xf32>
    %51 = arith.mulf %47, %50 : vector<8x256xf32>
    %52 = arith.addf %46, %51 : vector<8x256xf32>
    %53 = vector.extract_strided_slice %52 {offsets = [0, 0], sizes = [1, 256], strides = [1, 1]} : vector<8x256xf32> to vector<1x256xf32>
    %c0_20 = arith.constant 0 : index
    %c0_21 = arith.constant 0 : index
    %c0_22 = arith.constant 0 : index
    %54 = vector.load %arg3[%c0_20, %c0_21, %c0_22] : memref<4x8x1xf32, #tpu.memory_space<vmem>>, vector<1x8x1xf32>
    %55 = vector.shape_cast %54 : vector<1x8x1xf32> to vector<8x1xf32>
    %56 = vector.broadcast %53 : vector<1x256xf32> to vector<8x256xf32>
    %57 = vector.broadcast %55 : vector<8x1xf32> to vector<8x256xf32>
    %58 = arith.mulf %56, %57 : vector<8x256xf32>
    %59 = vector.extract_strided_slice %52 {offsets = [1, 0], sizes = [1, 256], strides = [1, 1]} : vector<8x256xf32> to vector<1x256xf32>
    %c1_23 = arith.constant 1 : index
    %c0_24 = arith.constant 0 : index
    %c0_25 = arith.constant 0 : index
    %60 = vector.load %arg3[%c1_23, %c0_24, %c0_25] : memref<4x8x1xf32, #tpu.memory_space<vmem>>, vector<1x8x1xf32>
    %61 = vector.shape_cast %60 : vector<1x8x1xf32> to vector<8x1xf32>
    %62 = vector.broadcast %59 : vector<1x256xf32> to vector<8x256xf32>
    %63 = vector.broadcast %61 : vector<8x1xf32> to vector<8x256xf32>
    %64 = arith.mulf %62, %63 : vector<8x256xf32>
    %65 = arith.addf %58, %64 : vector<8x256xf32>
    %66 = vector.extract_strided_slice %52 {offsets = [2, 0], sizes = [1, 256], strides = [1, 1]} : vector<8x256xf32> to vector<1x256xf32>
    %c2_26 = arith.constant 2 : index
    %c0_27 = arith.constant 0 : index
    %c0_28 = arith.constant 0 : index
    %67 = vector.load %arg3[%c2_26, %c0_27, %c0_28] : memref<4x8x1xf32, #tpu.memory_space<vmem>>, vector<1x8x1xf32>
    %68 = vector.shape_cast %67 : vector<1x8x1xf32> to vector<8x1xf32>
    %69 = vector.broadcast %66 : vector<1x256xf32> to vector<8x256xf32>
    %70 = vector.broadcast %68 : vector<8x1xf32> to vector<8x256xf32>
    %71 = arith.mulf %69, %70 : vector<8x256xf32>
    %72 = arith.addf %65, %71 : vector<8x256xf32>
    %73 = vector.extract_strided_slice %52 {offsets = [3, 0], sizes = [1, 256], strides = [1, 1]} : vector<8x256xf32> to vector<1x256xf32>
    %c3_29 = arith.constant 3 : index
    %c0_30 = arith.constant 0 : index
    %c0_31 = arith.constant 0 : index
    %74 = vector.load %arg3[%c3_29, %c0_30, %c0_31] : memref<4x8x1xf32, #tpu.memory_space<vmem>>, vector<1x8x1xf32>
    %75 = vector.shape_cast %74 : vector<1x8x1xf32> to vector<8x1xf32>
    %76 = vector.broadcast %73 : vector<1x256xf32> to vector<8x256xf32>
    %77 = vector.broadcast %75 : vector<8x1xf32> to vector<8x256xf32>
    %78 = arith.mulf %76, %77 : vector<8x256xf32>
    %79 = arith.addf %72, %78 : vector<8x256xf32>
    %c0_32 = arith.constant 0 : index
    %c0_33 = arith.constant 0 : index
    %80 = vector.load %arg4[%c0_32, %c0_33] : memref<16x256xf32, #tpu.memory_space<vmem>>, vector<8x256xf32>
    tpu.vector_store %arg4[%c0_32, %c0_33], %79 {strides = array<i32>} : memref<16x256xf32, #tpu.memory_space<vmem>>, vector<8x256xf32>,
    %81 = vector.extract_strided_slice %52 {offsets = [4, 0], sizes = [1, 256], strides = [1, 1]} : vector<8x256xf32> to vector<1x256xf32>
    %c0_34 = arith.constant 0 : index
    %c0_35 = arith.constant 0 : index
    %c0_36 = arith.constant 0 : index
    %82 = vector.load %arg3[%c0_34, %c0_35, %c0_36] : memref<4x8x1xf32, #tpu.memory_space<vmem>>, vector<1x8x1xf32>
    %83 = vector.shape_cast %82 : vector<1x8x1xf32> to vector<8x1xf32>
    %84 = vector.broadcast %81 : vector<1x256xf32> to vector<8x256xf32>
    %85 = vector.broadcast %83 : vector<8x1xf32> to vector<8x256xf32>
    %86 = arith.mulf %84, %85 : vector<8x256xf32>
    %87 = vector.extract_strided_slice %52 {offsets = [5, 0], sizes = [1, 256], strides = [1, 1]} : vector<8x256xf32> to vector<1x256xf32>
    %c1_37 = arith.constant 1 : index
    %c0_38 = arith.constant 0 : index
    %c0_39 = arith.constant 0 : index
    %88 = vector.load %arg3[%c1_37, %c0_38, %c0_39] : memref<4x8x1xf32, #tpu.memory_space<vmem>>, vector<1x8x1xf32>
    %89 = vector.shape_cast %88 : vector<1x8x1xf32> to vector<8x1xf32>
    %90 = vector.broadcast %87 : vector<1x256xf32> to vector<8x256xf32>
    %91 = vector.broadcast %89 : vector<8x1xf32> to vector<8x256xf32>
    %92 = arith.mulf %90, %91 : vector<8x256xf32>
    %93 = arith.addf %86, %92 : vector<8x256xf32>
    %94 = vector.extract_strided_slice %52 {offsets = [6, 0], sizes = [1, 256], strides = [1, 1]} : vector<8x256xf32> to vector<1x256xf32>
    %c2_40 = arith.constant 2 : index
    %c0_41 = arith.constant 0 : index
    %c0_42 = arith.constant 0 : index
    %95 = vector.load %arg3[%c2_40, %c0_41, %c0_42] : memref<4x8x1xf32, #tpu.memory_space<vmem>>, vector<1x8x1xf32>
    %96 = vector.shape_cast %95 : vector<1x8x1xf32> to vector<8x1xf32>
    %97 = vector.broadcast %94 : vector<1x256xf32> to vector<8x256xf32>
    %98 = vector.broadcast %96 : vector<8x1xf32> to vector<8x256xf32>
    %99 = arith.mulf %97, %98 : vector<8x256xf32>
    %100 = arith.addf %93, %99 : vector<8x256xf32>
    %101 = vector.extract_strided_slice %52 {offsets = [7, 0], sizes = [1, 256], strides = [1, 1]} : vector<8x256xf32> to vector<1x256xf32>
    %c3_43 = arith.constant 3 : index
    %c0_44 = arith.constant 0 : index
    %c0_45 = arith.constant 0 : index
    %102 = vector.load %arg3[%c3_43, %c0_44, %c0_45] : memref<4x8x1xf32, #tpu.memory_space<vmem>>, vector<1x8x1xf32>
    %103 = vector.shape_cast %102 : vector<1x8x1xf32> to vector<8x1xf32>
    %104 = vector.broadcast %101 : vector<1x256xf32> to vector<8x256xf32>
    %105 = vector.broadcast %103 : vector<8x1xf32> to vector<8x256xf32>
    %106 = arith.mulf %104, %105 : vector<8x256xf32>
    %107 = arith.addf %100, %106 : vector<8x256xf32>
    %c8_46 = arith.constant 8 : index
    %c0_47 = arith.constant 0 : index
    %108 = vector.load %arg4[%c8_46, %c0_47] : memref<16x256xf32, #tpu.memory_space<vmem>>, vector<8x256xf32>
    tpu.vector_store %arg4[%c8_46, %c0_47], %107 {strides = array<i32>} : memref<16x256xf32, #tpu.memory_space<vmem>>, vector<8x256xf32>,
    return
  }
  func.func @transform_0(%arg0: i32) -> (i32, i32) {
    %c0_i32 = arith.constant 0 : i32
    %c0_i32_0 = arith.constant 0 : i32
    %c0_i32_1 = arith.constant 0 : i32
    return %c0_i32, %c0_i32_0 : i32, i32
  }
  func.func @transform_1(%arg0: i32) -> (i32, i32, i32) {
    %c0_i32 = arith.constant 0 : i32
    %c0_i32_0 = arith.constant 0 : i32
    %c0_i32_1 = arith.constant 0 : i32
    %c0_i32_2 = arith.constant 0 : i32
    return %c0_i32, %c0_i32_0, %c0_i32_1 : i32, i32, i32
  }
  func.func @transform_2(%arg0: i32) -> (i32, i32, i32) {
    %c0_i32 = arith.constant 0 : i32
    %c0_i32_0 = arith.constant 0 : i32
    %c0_i32_1 = arith.constant 0 : i32
    %c0_i32_2 = arith.constant 0 : i32
    return %c0_i32, %c0_i32_0, %c0_i32_1 : i32, i32, i32
  }
  func.func @transform_3(%arg0: i32) -> (i32, i32) {
    %c0_i32 = arith.constant 0 : i32
    %c0_i32_0 = arith.constant 0 : i32
    %c0_i32_1 = arith.constant 0 : i32
    return %c0_i32, %c0_i32_0 : i32, i32
  }
}

</mosaic_0001>

<llo_original>
// kernel: tpu_custom_call.1
$region0: #{tpu_custom_call.1}
  #allocation0 [shape = 'u32[]', space=smem, size = 0x4, offset = 0x4, fixed_abs, tag = 'smem constant byte address 0x4 - core index']
  #allocation1 [shape = 'u32[144,128]{1,0:T(1,128)}', space=vmem, size = 0x12000, scoped, tag = 'internal scratch']
  %s0 = inlined_call_operand.vmem [shape: f32[8,256], index: 0, kind: input, shape index: {}]
  %s1 = inlined_call_operand.vmem [shape: f32[9,8,1], index: 1, kind: input, shape index: {}]
  %s2 = inlined_call_operand.vmem [shape: f32[4,8,1], index: 2, kind: input, shape index: {}]
  %s3 = inlined_call_operand.hbm [shape: f32[16,256], index: 3, kind: output, shape index: {}]
  %s4 = sld [smem:[#allocation0]]
  $region22: #{tpu_custom_call.1} parent=0
    _
  %s6 = ssub.s32 1, %s4
  %s7 = scalar_select 0, %s6, %s4
  $region1: #{tpu_custom_call.1} parent=0
    #allocation2 [shape = 'u8[16384]{0}', space=vmem, size = 0x4000, scoped, tag = 'output window, operand 0, single buffered']
    #allocation3 [shape = 's32[1]{0}', space=sflag, size = 0x4, scoped, tag = 'scoped memory for tpu_custom_call.1']
    %8 = vsyncpa [#allocation3], 0
    // Predicated region
    $region2: #{tpu_custom_call.1} parent=1 // pred_check
      _
    $region3: #{tpu_custom_call.1} parent=1 // pred_check_branch
      %10 = sbr.rel (0) target = $region5
    $region4: #{tpu_custom_call.1} parent=1 // pred_region
      _
    $region5: #{tpu_custom_call.1} parent=1 // pred_fallthru
      _
    // Predicated region
    $region6: #{tpu_custom_call.1} parent=1 // pred_check
      _
    $region7: #{tpu_custom_call.1} parent=1 // pred_check_branch
      %12 = sbr.rel (0) target = $region9
    $region8: #{tpu_custom_call.1} parent=1 // pred_region
      _
    $region9: #{tpu_custom_call.1} parent=1 // pred_fallthru
      _
    // Predicated region
    $region10: #{tpu_custom_call.1} parent=1 // pred_check
      _
    $region11: #{tpu_custom_call.1} parent=1 // pred_check_branch
      %14 = sbr.rel (0) target = $region13
    $region12: #{tpu_custom_call.1} parent=1 // pred_region
      _
    $region13: #{tpu_custom_call.1} parent=1 // pred_fallthru
      _
    %v15 = vld [vmem:[%s0] sm:$0xff]
    %v16 = vld [vmem:[%s0 + $0x8] sm:$0xff]
    %v17 = vld [vmem:[%s1] sm:$0xff]
    %19 = vset.pattern.permute.xlu0 0
    %20 = vperm.xlu0 %19, %v17
    %v21 = vpop.permute.xlu0 %20
    %v23 = vmul.f32 %v15, %v21
    %v24 = vmul.f32 %v16, %v21
    %25 = vrot.lane.b32.xlu0 %v15, 127
    %v26 = vpop.permute.xlu0 %25
    %27 = vrot.lane.b32.xlu0 %v16, 127
    %v28 = vpop.permute.xlu0 %27
    %v29 = vlaneseq
    %v30 = vand.u32 %v29, 127
    %vm31 = vcmp.lt.s32.totalorder %v30, 127
    %v32 = vsel %vm31, %v26, %v28
    %v33 = vsel %vm31, %v28, %v26
    %s34 = scalar_lea.vmem %s1, 8
    %v35 = vld [vmem:[%s34] sm:$0xff]
    %37 = vset.pattern.permute.xlu0 0
    %38 = vperm.xlu0 %37, %v35
    %v39 = vpop.permute.xlu0 %38
    %v41 = vmul.f32 %v32, %v39
    %v42 = vmul.f32 %v33, %v39
    %v43 = vadd.f32 %v23, %v41
    %v44 = vadd.f32 %v24, %v42
    %45 = vrot.lane.b32.xlu0 %v15, 126
    %v46 = vpop.permute.xlu0 %45
    %47 = vrot.lane.b32.xlu0 %v16, 126
    %v48 = vpop.permute.xlu0 %47
    %vm49 = vcmp.lt.s32.totalorder %v30, 126
    %v50 = vsel %vm49, %v46, %v48
    %v51 = vsel %vm49, %v48, %v46
    %s52 = scalar_lea.vmem %s1, 16
    %v53 = vld [vmem:[%s52] sm:$0xff]
    %55 = vset.pattern.permute.xlu0 0
    %56 = vperm.xlu0 %55, %v53
    %v57 = vpop.permute.xlu0 %56
    %v59 = vmul.f32 %v50, %v57
    %v60 = vmul.f32 %v51, %v57
    %v61 = vadd.f32 %v43, %v59
    %v62 = vadd.f32 %v44, %v60
    %63 = vrot.lane.b32.xlu0 %v15, 112
    %v64 = vpop.permute.xlu0 %63
    %65 = vrot.lane.b32.xlu0 %v16, 112
    %v66 = vpop.permute.xlu0 %65
    %vm67 = vcmp.lt.s32.totalorder %v30, 112
    %v68 = vsel %vm67, %v64, %v66
    %v69 = vsel %vm67, %v66, %v64
    %s70 = scalar_lea.vmem %s1, 24
    %v71 = vld [vmem:[%s70] sm:$0xff]
    %73 = vset.pattern.permute.xlu0 0
    %74 = vperm.xlu0 %73, %v71
    %v75 = vpop.permute.xlu0 %74
    %v77 = vmul.f32 %v68, %v75
    %v78 = vmul.f32 %v69, %v75
    %v79 = vadd.f32 %v61, %v77
    %v80 = vadd.f32 %v62, %v78
    %81 = vrot.lane.b32.xlu0 %v15, 111
    %v82 = vpop.permute.xlu0 %81
    %83 = vrot.lane.b32.xlu0 %v16, 111
    %v84 = vpop.permute.xlu0 %83
    %vm85 = vcmp.lt.s32.totalorder %v30, 111
    %v86 = vsel %vm85, %v82, %v84
    %v87 = vsel %vm85, %v84, %v82
    %s88 = scalar_lea.vmem %s1, 32
    %v89 = vld [vmem:[%s88] sm:$0xff]
    %91 = vset.pattern.permute.xlu0 0
    %92 = vperm.xlu0 %91, %v89
    %v93 = vpop.permute.xlu0 %92
    %v95 = vmul.f32 %v86, %v93
    %v96 = vmul.f32 %v87, %v93
    %v97 = vadd.f32 %v79, %v95
    %v98 = vadd.f32 %v80, %v96
    %99 = vrot.lane.b32.xlu0 %v15, 110
    %v100 = vpop.permute.xlu0 %99
    %101 = vrot.lane.b32.xlu0 %v16, 110
    %v102 = vpop.permute.xlu0 %101
    %vm103 = vcmp.lt.s32.totalorder %v30, 110
    %v104 = vsel %vm103, %v100, %v102
    %v105 = vsel %vm103, %v102, %v100
    %s106 = scalar_lea.vmem %s1, 40
    %v107 = vld [vmem:[%s106] sm:$0xff]
    %109 = vset.pattern.permute.xlu0 0
    %110 = vperm.xlu0 %109, %v107
    %v111 = vpop.permute.xlu0 %110
    %v113 = vmul.f32 %v104, %v111
    %v114 = vmul.f32 %v105, %v111
    %v115 = vadd.f32 %v97, %v113
    %v116 = vadd.f32 %v98, %v114
    %117 = vrot.lane.b32.xlu0 %v15, 96
    %v118 = vpop.permute.xlu0 %117
    %119 = vrot.lane.b32.xlu0 %v16, 96
    %v120 = vpop.permute.xlu0 %119
    %vm121 = vcmp.lt.s32.totalorder %v30, 96
    %v122 = vsel %vm121, %v118, %v120
    %v123 = vsel %vm121, %v120, %v118
    %s124 = scalar_lea.vmem %s1, 48
    %v125 = vld [vmem:[%s124] sm:$0xff]
    %127 = vset.pattern.permute.xlu0 0
    %128 = vperm.xlu0 %127, %v125
    %v129 = vpop.permute.xlu0 %128
    %v131 = vmul.f32 %v122, %v129
    %v132 = vmul.f32 %v123, %v129
    %v133 = vadd.f32 %v115, %v131
    %v134 = vadd.f32 %v116, %v132
    %135 = vrot.lane.b32.xlu0 %v15, 95
    %v136 = vpop.permute.xlu0 %135
    %137 = vrot.lane.b32.xlu0 %v16, 95
    %v138 = vpop.permute.xlu0 %137
    %vm139 = vcmp.lt.s32.totalorder %v30, 95
    %v140 = vsel %vm139, %v136, %v138
    %v141 = vsel %vm139, %v138, %v136
    %s142 = scalar_lea.vmem %s1, 56
    %v143 = vld [vmem:[%s142] sm:$0xff]
    %145 = vset.pattern.permute.xlu0 0
    %146 = vperm.xlu0 %145, %v143
    %v147 = vpop.permute.xlu0 %146
    %v149 = vmul.f32 %v140, %v147
    %v150 = vmul.f32 %v141, %v147
    %v151 = vadd.f32 %v133, %v149
    %v152 = vadd.f32 %v134, %v150
    %153 = vrot.lane.b32.xlu0 %v15, 94
    %v154 = vpop.permute.xlu0 %153
    %155 = vrot.lane.b32.xlu0 %v16, 94
    %v156 = vpop.permute.xlu0 %155
    %vm157 = vcmp.lt.s32.totalorder %v30, 94
    %v158 = vsel %vm157, %v154, %v156
    %v159 = vsel %vm157, %v156, %v154
    %s160 = scalar_lea.vmem %s1, 64
    %v161 = vld [vmem:[%s160] sm:$0xff]
    %163 = vset.pattern.permute.xlu0 0
    %164 = vperm.xlu0 %163, %v161
    %v165 = vpop.permute.xlu0 %164
    %v167 = vmul.f32 %v158, %v165
    %v168 = vmul.f32 %v159, %v165
    %v169 = vadd.f32 %v151, %v167
    %v170 = vadd.f32 %v152, %v168
    %v171 = vld [vmem:[%s2] sm:$0xff]
    %v172 = vlaneseq
    %v173 = vshrl.u32 %v172, 7
    %v174 = vsub.s32 0, %v173
    %v175 = vrot.slane %v169, %v174
    %v176 = vlaneseq
    %v177 = vshrl.u32 %v176, 7
    %v178 = vsub.s32 0, %v177
    %v179 = vrot.slane %v170, %v178
    %181 = vset.pattern.permute.xlu0 0
    %182 = vperm.xlu0 %181, %v171
    %v183 = vpop.permute.xlu0 %182
    %v185 = vmul.f32 %v175, %v183
    %v186 = vmul.f32 %v179, %v183
    %s187 = scalar_lea.vmem %s2, 8
    %v188 = vld [vmem:[%s187] sm:$0xff]
    %v189 = vlaneseq
    %v190 = vshrl.u32 %v189, 7
    %v191 = vsub.s32 1, %v190
    %v192 = vrot.slane %v169, %v191
    %v193 = vlaneseq
    %v194 = vshrl.u32 %v193, 7
    %v195 = vsub.s32 1, %v194
    %v196 = vrot.slane %v170, %v195
    %198 = vset.pattern.permute.xlu0 0
    %199 = vperm.xlu0 %198, %v188
    %v200 = vpop.permute.xlu0 %199
    %v202 = vmul.f32 %v192, %v200
    %v203 = vmul.f32 %v196, %v200
    %v204 = vadd.f32 %v185, %v202
    %v205 = vadd.f32 %v186, %v203
    %s206 = scalar_lea.vmem %s2, 16
    %v207 = vld [vmem:[%s206] sm:$0xff]
    %v208 = vlaneseq
    %v209 = vshrl.u32 %v208, 7
    %v210 = vsub.s32 2, %v209
    %v211 = vrot.slane %v169, %v210
    %v212 = vlaneseq
    %v213 = vshrl.u32 %v212, 7
    %v214 = vsub.s32 2, %v213
    %v215 = vrot.slane %v170, %v214
    %217 = vset.pattern.permute.xlu0 0
    %218 = vperm.xlu0 %217, %v207
    %v219 = vpop.permute.xlu0 %218
    %v221 = vmul.f32 %v211, %v219
    %v222 = vmul.f32 %v215, %v219
    %v223 = vadd.f32 %v204, %v221
    %v224 = vadd.f32 %v205, %v222
    %s225 = scalar_lea.vmem %s2, 24
    %v226 = vld [vmem:[%s225] sm:$0xff]
    %v227 = vlaneseq
    %v228 = vshrl.u32 %v227, 7
    %v229 = vsub.s32 3, %v228
    %v230 = vrot.slane %v169, %v229
    %v231 = vlaneseq
    %v232 = vshrl.u32 %v231, 7
    %v233 = vsub.s32 3, %v232
    %v234 = vrot.slane %v170, %v233
    %236 = vset.pattern.permute.xlu0 0
    %237 = vperm.xlu0 %236, %v226
    %v238 = vpop.permute.xlu0 %237
    %v240 = vmul.f32 %v230, %v238
    %v241 = vmul.f32 %v234, %v238
    %v242 = vadd.f32 %v223, %v240
    %v243 = vadd.f32 %v224, %v241
    %244 = vst [vmem:[#allocation2] sm:$0xff] %v242
    %245 = vst [vmem:[#allocation2 + $0x8] sm:$0xff] %v243
    %v246 = vld [vmem:[%s2] sm:$0xff]
    %v247 = vlaneseq
    %v248 = vshrl.u32 %v247, 7
    %v249 = vsub.s32 4, %v248
    %v250 = vrot.slane %v169, %v249
    %v251 = vlaneseq
    %v252 = vshrl.u32 %v251, 7
    %v253 = vsub.s32 4, %v252
    %v254 = vrot.slane %v170, %v253
    %256 = vset.pattern.permute.xlu0 0
    %257 = vperm.xlu0 %256, %v246
    %v258 = vpop.permute.xlu0 %257
    %v260 = vmul.f32 %v250, %v258
    %v261 = vmul.f32 %v254, %v258
    %v262 = vld [vmem:[%s187] sm:$0xff]
    %v263 = vlaneseq
    %v264 = vshrl.u32 %v263, 7
    %v265 = vsub.s32 5, %v264
    %v266 = vrot.slane %v169, %v265
    %v267 = vlaneseq
    %v268 = vshrl.u32 %v267, 7
    %v269 = vsub.s32 5, %v268
    %v270 = vrot.slane %v170, %v269
    %272 = vset.pattern.permute.xlu0 0
    %273 = vperm.xlu0 %272, %v262
    %v274 = vpop.permute.xlu0 %273
    %v276 = vmul.f32 %v266, %v274
    %v277 = vmul.f32 %v270, %v274
    %v278 = vadd.f32 %v260, %v276
    %v279 = vadd.f32 %v261, %v277
    %v280 = vld [vmem:[%s206] sm:$0xff]
    %v281 = vlaneseq
    %v282 = vshrl.u32 %v281, 7
    %v283 = vsub.s32 6, %v282
    %v284 = vrot.slane %v169, %v283
    %v285 = vlaneseq
    %v286 = vshrl.u32 %v285, 7
    %v287 = vsub.s32 6, %v286
    %v288 = vrot.slane %v170, %v287
    %290 = vset.pattern.permute.xlu0 0
    %291 = vperm.xlu0 %290, %v280
    %v292 = vpop.permute.xlu0 %291
    %v294 = vmul.f32 %v284, %v292
    %v295 = vmul.f32 %v288, %v292
    %v296 = vadd.f32 %v278, %v294
    %v297 = vadd.f32 %v279, %v295
    %v298 = vld [vmem:[%s225] sm:$0xff]
    %v299 = vlaneseq
    %v300 = vshrl.u32 %v299, 7
    %v301 = vsub.s32 7, %v300
    %v302 = vrot.slane %v169, %v301
    %v303 = vlaneseq
    %v304 = vshrl.u32 %v303, 7
    %v305 = vsub.s32 7, %v304
    %v306 = vrot.slane %v170, %v305
    %308 = vset.pattern.permute.xlu0 0
    %309 = vperm.xlu0 %308, %v298
    %v310 = vpop.permute.xlu0 %309
    %v312 = vmul.f32 %v302, %v310
    %v313 = vmul.f32 %v306, %v310
    %v314 = vadd.f32 %v296, %v312
    %v315 = vadd.f32 %v297, %v313
    %316 = vst [vmem:[#allocation2 + $0x10] sm:$0xff] %v314
    %317 = vst [vmem:[#allocation2 + $0x18] sm:$0xff] %v315
    // Predicated region
    $region14: #{tpu_custom_call.1} parent=1 // pred_check
      _
    $region15: #{tpu_custom_call.1} parent=1 // pred_check_branch
      %319 = sbr.rel (0) target = $region17
    $region16: #{tpu_custom_call.1} parent=1 // pred_region
      %s321 = ssub.s32 512, 512
      %322 = vsyncadd [#allocation3], %s321
      %s323 = sshll.u32 [#allocation2], 4
      %s324 = int_to_ptr.vmem [resolvable:$true] %s323
      %329 = dma.vmem_to_hbm [thread:$0]  %s324, 512, %s3, [#allocation3], 256, 256, 16
    $region17: #{tpu_custom_call.1} parent=1 // pred_fallthru
      _
    // Predicated region
    $region18: #{tpu_custom_call.1} parent=1 // pred_check
      _
    $region19: #{tpu_custom_call.1} parent=1 // pred_check_branch
      %331 = sbr.rel (0) target = $region21
    $region20: #{tpu_custom_call.1} parent=1 // pred_region
      %332 = dma.done [#allocation3], 512
    $region21: #{tpu_custom_call.1} parent=1 // pred_fallthru
      _
    %333 = vsyncpa [#allocation3], 1

</llo_original>
